<compile_context>
chip_gen: v5e
topology: v5e:2x2
jax: 0.10.0
libtpu: 0.0.40
codegen_flags: <defaults>
</compile_context>

<pallas_src>
import functools

import jax
import jax.numpy as jnp
from jax.experimental import pallas as pl
from jax.experimental.pallas import tpu as pltpu


def _make_positional_table(num_hiddens: int, max_len: int) -> jnp.ndarray:
    """Deterministic sinusoidal table, identical to the PyTorch __init__."""
    pos = jnp.arange(max_len, dtype=jnp.float32).reshape(-1, 1)
    div = jnp.power(
        jnp.float32(10000.0),
        jnp.arange(0, num_hiddens, 2, dtype=jnp.float32) / num_hiddens,
    )
    ang = pos / div  # (max_len, num_hiddens // 2)
    P = jnp.zeros((1, max_len, num_hiddens), dtype=jnp.float32)
    P = P.at[:, :, 0::2].set(jnp.sin(ang))
    P = P.at[:, :, 1::2].set(jnp.cos(ang))
    return P


def _pick_lane_tile(total: int, target: int) -> int:
    """Largest multiple of 128 dividing `total` and <= target, else full extent."""
    if total <= target or total % 128 != 0:
        return total
    t = (min(target, total) // 128) * 128
    while t >= 128:
        if total % t == 0:
            return t
        t -= 128
    return total


def _pick_batch_tile(batch: int, target: int) -> int:
    """Largest multiple of 8 dividing `batch` and <= target, else full extent."""
    if batch <= target:
        return batch
    t = (min(target, batch) // 8) * 8
    while t >= 8:
        if batch % t == 0:
            return t
        t -= 8
    return batch


def _pe_dropout_kernel(seed_ref, x_ref, p_ref, o_ref, *, dropout_p: float,
                       total_cols: int):
    # x_ref: (tb, tl), p_ref: (1, tl) -> broadcast add over the batch rows.
    y = x_ref[...].astype(jnp.float32) + p_ref[...].astype(jnp.float32)

    if dropout_p > 0.0:
        tb, tl = x_ref.shape
        # Global element index of every lane in this tile (decorrelates the mask
        # across grid tiles without any stateful PRNG).
        rows = jax.lax.broadcasted_iota(jnp.int32, (tb, tl), 0) + pl.program_id(0) * tb
        cols = jax.lax.broadcasted_iota(jnp.int32, (tb, tl), 1) + pl.program_id(1) * tl
        idx = (rows * total_cols + cols).astype(jnp.uint32)

        seed = seed_ref[0].astype(jnp.uint32)
        # Stateless hash: golden-ratio seed mix + murmur3 fmix32 finalizer.
        z = idx + seed * jnp.uint32(0x9E3779B9)
        z = (z ^ (z >> jnp.uint32(16))) * jnp.uint32(0x85EBCA6B)
        z = (z ^ (z >> jnp.uint32(13))) * jnp.uint32(0xC2B2AE35)
        z = z ^ (z >> jnp.uint32(16))

        # Integer threshold compare: keep with prob (1 - p).
        thresh = jnp.uint32(min(int(dropout_p * (2 ** 32)), 2 ** 32 - 1))
        keep = z >= thresh
        scale = jnp.float32(1.0 / (1.0 - dropout_p))
        y = jnp.where(keep, y * scale, jnp.float32(0.0))

    o_ref[...] = y.astype(o_ref.dtype)


def positional_encoding_forward(x, P, *, dropout_p: float, seed: int = 0,
                                lane_tile_target: int = 4096,
                                batch_tile_target: int = 64):
    """Pallas equivalent of PositionalEncoding.forward(X).

    x: (B, S, H).  P: (1, max_len, H) precomputed sinusoidal table.
    """
    B, S, H = x.shape
    total_cols = S * H

    # Lane-dense layout: collapse (S, H) onto the lane axis; P broadcasts over B.
    x2 = x.reshape(B, total_cols)
    p2 = P[:, :S, :].astype(x.dtype).reshape(1, total_cols)

    tl = _pick_lane_tile(total_cols, lane_tile_target)
    tb = _pick_batch_tile(B, batch_tile_target)
    grid = (B // tb, total_cols // tl)

    seed_arr = jnp.array([seed], dtype=jnp.int32)
    kernel = functools.partial(_pe_dropout_kernel,
                               dropout_p=float(dropout_p),
                               total_cols=total_cols)

    out2 = pl.pallas_call(
        kernel,
        out_shape=jax.ShapeDtypeStruct((B, total_cols), x.dtype),
        grid_spec=pltpu.PrefetchScalarGridSpec(
            num_scalar_prefetch=1,           # seed lands in SMEM
            grid=grid,
            in_specs=[
                pl.BlockSpec((tb, tl), lambda b, c, seed: (b, c)),
                pl.BlockSpec((1, tl), lambda b, c, seed: (0, c)),  # P reused per batch tile
            ],
            out_specs=pl.BlockSpec((tb, tl), lambda b, c, seed: (b, c)),
        ),
        compiler_params=pltpu.CompilerParams(
            # Batch axis is data-parallel (shards across v7x's 2 TCs); lane axis
            # iterates with double-buffered pipelining.
            dimension_semantics=("parallel", "arbitrary"),
        ),
    )(seed_arr, x2, p2)

    # TODO(synk): in a full Decoder stack, fuse the preceding embedding scale
    # (X * sqrt(num_hiddens)) into this kernel to save one HBM round trip.
    return out2.reshape(B, S, H)


if __name__ == "__main__":
    # Small shapes consistent with the module's (B, S, H) convention.
    batch, seq, num_hiddens, max_len = 2, 8, 32, 64
    dropout_p = 0.1

    key = jax.random.PRNGKey(0)
    x = jax.random.normal(key, (batch, seq, num_hiddens), dtype=jnp.float32)
    P = _make_positional_table(num_hiddens, max_len)

    # 1) Eval-mode semantics (dropout disabled): must match X + P[:, :S, :].
    out_eval = jax.block_until_ready(
        positional_encoding_forward(x, P, dropout_p=0.0, seed=0))
    ref = x + P[:, :seq, :]
    assert jnp.allclose(out_eval, ref, atol=1e-6, rtol=1e-6), "eval mismatch"

    # 2) Training-mode semantics: every output element is either 0 (dropped)
    #    or (x + p) / (1 - p) (kept), matching nn.Dropout's inverted dropout.
    out_train = jax.block_until_ready(
        positional_encoding_forward(x, P, dropout_p=dropout_p, seed=1234))
    scaled = ref * jnp.float32(1.0 / (1.0 - dropout_p))
    ok = jnp.isclose(out_train, 0.0, atol=1e-6) | jnp.isclose(
        out_train, scaled, atol=1e-5, rtol=1e-5)
    assert bool(jnp.all(ok)), "train-mode structure mismatch"

    # 3) Larger shape exercising a multi-tile grid (pipelined, per-tile masks).
    B2, S2, H2 = 8, 64, 128
    x2 = jax.random.normal(jax.random.PRNGKey(1), (B2, S2, H2), dtype=jnp.float32)
    P2 = _make_positional_table(H2, S2)
    out2 = jax.block_until_ready(
        positional_encoding_forward(x2, P2, dropout_p=dropout_p, seed=7,
                                    lane_tile_target=2048, batch_tile_target=8))
    ref2 = x2 + P2[:, :S2, :]
    scaled2 = ref2 * jnp.float32(1.0 / (1.0 - dropout_p))
    ok2 = jnp.isclose(out2, 0.0, atol=1e-6) | jnp.isclose(
        out2, scaled2, atol=1e-5, rtol=1e-5)
    assert bool(jnp.all(ok2)), "tiled train-mode structure mismatch"
    keep_frac = float(jnp.mean(jnp.abs(out2) > 0))
    assert 0.75 < keep_frac < 0.99, f"unexpected keep fraction {keep_frac}"

    print("KERNEL_OK")
</pallas_src>

<mosaic_0001>
module attributes {stable_mosaic.version = 11 : i64} {
  func.func @_pe_dropout_kernel(%arg0: i32, %arg1: i32, %arg2: memref<1xi32, #tpu.memory_space<smem>>, %arg3: memref<2x256xf32, #tpu.memory_space<vmem>>, %arg4: memref<1x256xf32, #tpu.memory_space<vmem>>, %arg5: memref<2x256xf32, #tpu.memory_space<vmem>>) attributes {dimension_semantics = [#tpu.dimension_semantics<parallel>, #tpu.dimension_semantics<arbitrary>], iteration_bounds = array<i64: 1, 1>, scalar_prefetch = 1 : i64, scratch_operands = 0 : i64, tpu.core_type = #tpu.core_type<tc>, window_params = [{transform_indices = @transform_0, window_bounds = array<i64: 2, 256>}, {transform_indices = @transform_1, window_bounds = array<i64: 1, 256>}, {transform_indices = @transform_2, window_bounds = array<i64: 2, 256>}]} {
    %c0 = arith.constant 0 : index
    %c0_0 = arith.constant 0 : index
    %0 = vector.load %arg3[%c0, %c0_0] : memref<2x256xf32, #tpu.memory_space<vmem>>, vector<2x256xf32>
    %c0_1 = arith.constant 0 : index
    %c0_2 = arith.constant 0 : index
    %1 = vector.load %arg4[%c0_1, %c0_2] : memref<1x256xf32, #tpu.memory_space<vmem>>, vector<1x256xf32>
    %2 = vector.broadcast %1 : vector<1x256xf32> to vector<2x256xf32>
    %3 = arith.addf %0, %2 : vector<2x256xf32>
    %c0_3 = arith.constant 0 : index
    %c0_4 = arith.constant 0 : index
    %4 = vector.load %arg5[%c0_3, %c0_4] : memref<2x256xf32, #tpu.memory_space<vmem>>, vector<2x256xf32>
    tpu.vector_store %arg5[%c0_3, %c0_4], %3 {strides = array<i32>} : memref<2x256xf32, #tpu.memory_space<vmem>>, vector<2x256xf32>,
    return
  }
  func.func @transform_0(%arg0: i32, %arg1: i32, %arg2: memref<1xi32, #tpu.memory_space<smem>>) -> (i32, i32) {
    %c0_i32 = arith.constant 0 : i32
    return %arg0, %arg1 : i32, i32
  }
  func.func @transform_1(%arg0: i32, %arg1: i32, %arg2: memref<1xi32, #tpu.memory_space<smem>>) -> (i32, i32) {
    %c0_i32 = arith.constant 0 : i32
    %c0_i32_0 = arith.constant 0 : i32
    return %c0_i32, %arg1 : i32, i32
  }
  func.func @transform_2(%arg0: i32, %arg1: i32, %arg2: memref<1xi32, #tpu.memory_space<smem>>) -> (i32, i32) {
    %c0_i32 = arith.constant 0 : i32
    return %arg0, %arg1 : i32, i32
  }
}

</mosaic_0001>

<llo_original>
// kernel: tpu_custom_call.1
$region0: #{tpu_custom_call.1}
  #allocation0 [shape = 'u32[]', space=smem, size = 0x4, offset = 0x4, fixed_abs, tag = 'smem constant byte address 0x4 - core index']
  #allocation1 [shape = 'u32[72,128]{1,0:T(1,128)}', space=vmem, size = 0x9000, scoped, tag = 'internal scratch']
  #allocation2 [shape = 's32[1]{0}', space=sflag, size = 0x4, scoped, tag = 'scoped memory for tpu_custom_call.1']
  #allocation3 [shape = 's32[1]{0:T(128)S(6)}', space=smem, size = 0x200, scoped, tag = 'prefetched SMEM operand 0']
  %s0 = inlined_call_operand.<no memory space> [shape: s32[1], index: 0, kind: input, shape index: {}]
  %s1 = inlined_call_operand.hbm [shape: f32[2,256], index: 1, kind: input, shape index: {}]
  %s2 = inlined_call_operand.vmem [shape: f32[1,256], index: 2, kind: input, shape index: {}]
  %s3 = inlined_call_operand.hbm [shape: f32[2,256], index: 3, kind: output, shape index: {}]
  %s4 = sld [smem:[#allocation0]]
  $region22: #{tpu_custom_call.1} parent=0
    _
  %s6 = ssub.s32 1, %s4
  %s7 = scalar_select 0, %s6, %s4
  %8 = sst [smem:[#allocation3]] %s0
  $region1: #{tpu_custom_call.1} parent=0
    #allocation4 [shape = 'u8[2048]{0}', space=vmem, size = 0x800, scoped, tag = 'input window, operand 1, single buffered']
    #allocation5 [shape = 's32[1]{0}', space=sflag, size = 0x4, scoped, tag = 'scoped memory for tpu_custom_call.1']
    #allocation6 [shape = 's32[1]{0}', space=sflag, size = 0x4, scoped, tag = 'scoped memory for tpu_custom_call.1']
    #allocation7 [shape = 'u8[2048]{0}', space=vmem, size = 0x800, scoped, tag = 'output window, operand 0, single buffered']
    %9 = vsyncpa [#allocation5], 0
    %10 = vsyncpa [#allocation6], 0
    // Predicated region
    $region2: #{tpu_custom_call.1} parent=1 // pred_check
      _
    $region3: #{tpu_custom_call.1} parent=1 // pred_check_branch
      %12 = sbr.rel (0) target = $region5
    $region4: #{tpu_custom_call.1} parent=1 // pred_region
      %14 = vsyncadd [#allocation5], 0
      %s16 = sshll.u32 %s1, 4
      %s17 = int_to_ptr.hbm [resolvable:$true] %s16
      %s18 = sshll.u32 [#allocation4], 4
      %s19 = int_to_ptr.vmem [resolvable:$true] %s18
      %21 = dma.hbm_to_vmem [thread:$0]  %s17, 64, %s19, [#allocation5]
    $region5: #{tpu_custom_call.1} parent=1 // pred_fallthru
      _
    // Predicated region
    $region6: #{tpu_custom_call.1} parent=1 // pred_check
      _
    $region7: #{tpu_custom_call.1} parent=1 // pred_check_branch
      %23 = sbr.rel (0) target = $region9
    $region8: #{tpu_custom_call.1} parent=1 // pred_region
      _
    $region9: #{tpu_custom_call.1} parent=1 // pred_fallthru
      _
    // Predicated region
    $region10: #{tpu_custom_call.1} parent=1 // pred_check
      _
    $region11: #{tpu_custom_call.1} parent=1 // pred_check_branch
      %25 = sbr.rel (0) target = $region13
    $region12: #{tpu_custom_call.1} parent=1 // pred_region
      %27 = dma.done [#allocation5], 64
    $region13: #{tpu_custom_call.1} parent=1 // pred_fallthru
      _
    %v28 = vld [vmem:[#allocation4] sm:$0xf]
    %v29 = vld [vmem:[%s2] sm:$0x3]
    %v31 = vperm.slane %v29, 0
    %v32 = vperm.slane %v29, 1
    %v33 = vrot.slane %v32, 6
    %vm34 = vcmask 1041408
    %v35 = vsel %vm34, %v31, %v33
    %v37 = vadd.f32 %v28, %v35
    %38 = vst [vmem:[#allocation7] sm:$0xf] %v37
    // Predicated region
    $region14: #{tpu_custom_call.1} parent=1 // pred_check
      _
    $region15: #{tpu_custom_call.1} parent=1 // pred_check_branch
      %40 = sbr.rel (0) target = $region17
    $region16: #{tpu_custom_call.1} parent=1 // pred_region
      %42 = vsyncadd [#allocation6], 0
      %s44 = sshll.u32 [#allocation7], 4
      %s45 = int_to_ptr.vmem [resolvable:$true] %s44
      %s46 = sshll.u32 %s3, 4
      %s47 = int_to_ptr.hbm [resolvable:$true] %s46
      %49 = dma.vmem_to_hbm [thread:$0]  %s45, 64, %s47, [#allocation6]
    $region17: #{tpu_custom_call.1} parent=1 // pred_fallthru
      _
    // Predicated region
    $region18: #{tpu_custom_call.1} parent=1 // pred_check
      _
    $region19: #{tpu_custom_call.1} parent=1 // pred_check_branch
      %51 = sbr.rel (0) target = $region21
    $region20: #{tpu_custom_call.1} parent=1 // pred_region
      %53 = dma.done [#allocation6], 64
    $region21: #{tpu_custom_call.1} parent=1 // pred_fallthru
      _
    %54 = vsyncpa [#allocation5], 1
    %55 = vsyncpa [#allocation6], 1

</llo_original>
